<compile_context>
chip_gen: v7x
topology: tpu7x:2x2x1
jax: 0.10.0
libtpu: 0.0.40
codegen_flags: <defaults>
</compile_context>

<pallas_src>
import functools

import jax
import jax.numpy as jnp
from jax.experimental import pallas as pl
from jax.experimental.pallas import tpu as pltpu


def _round_up(x, m):
    return (x + m - 1) // m * m


# ---------------------------------------------------------------------------
# Pass 1 (with_bn only): conv matmul -> per-tile BN partial statistics.
# ---------------------------------------------------------------------------
def _conv_stats_kernel(p_ref, w_ref, sum_ref, sq_ref):
    # p_ref: (tM, K) matmul_dtype, w_ref: (K, Fp) matmul_dtype,
    # sum_ref / sq_ref: (1, 1, Fp) f32 per-tile partials.
    y = jnp.dot(p_ref[...], w_ref[...], preferred_element_type=jnp.float32)
    sum_ref[0] = jnp.sum(y, axis=0, keepdims=True)
    sq_ref[0] = jnp.sum(y * y, axis=0, keepdims=True)


# ---------------------------------------------------------------------------
# Pass 2: recompute conv matmul, fuse scale/shift (BN affine or conv bias)
# and ReLU, store only the F valid output channels.
# ---------------------------------------------------------------------------
def _conv_scale_shift_relu_kernel(p_ref, w_ref, scale_ref, shift_ref, o_ref, *,
                                  n_valid):
    # p_ref: (tM, K), w_ref: (K, Fp), scale/shift: (1, F) f32, o_ref: (tM, F).
    y = jnp.dot(p_ref[...], w_ref[...], preferred_element_type=jnp.float32)
    y = y[:, :n_valid]                                   # drop padded channels
    o_ref[...] = jnp.maximum(
        y * scale_ref[...] + shift_ref[...], 0.0).astype(o_ref.dtype)


# ---------------------------------------------------------------------------
# Wrapper: im2col glue + (optional stats pass) + fused conv/BN/ReLU pass.
# ---------------------------------------------------------------------------
def conv2d_batchnorm_relu(x, weight, bias, gamma, beta, *, stride=1, padding=1,
                          dilation=1, with_bn=True, eps=1e-5, tile_m=1024,
                          matmul_dtype=jnp.bfloat16):
    """x: (N, C_in, H, W) f32 NCHW.  weight: (F, C_in, kh, kw).  Returns NCHW."""
    N, C, H, W = x.shape
    F, _, kh, kw = weight.shape

    H_out = (H + 2 * padding - dilation * (kh - 1) - 1) // stride + 1
    W_out = (W + 2 * padding - dilation * (kw - 1) - 1) // stride + 1
    M = N * H_out * W_out
    K = C * kh * kw

    # ---- im2col glue in matmul_dtype (no f32 materialization + recast) ------
    x_nhwc = jnp.transpose(x, (0, 2, 3, 1)).astype(matmul_dtype)
    xp = jnp.pad(x_nhwc, ((0, 0), (padding, padding), (padding, padding), (0, 0)))
    taps = []
    for dy in range(kh):
        for dx in range(kw):
            h0, w0 = dy * dilation, dx * dilation
            taps.append(xp[:, h0:h0 + (H_out - 1) * stride + 1:stride,
                            w0:w0 + (W_out - 1) * stride + 1:stride, :])
    patches = jnp.stack(taps, axis=3).reshape(M, K)   # (M, kh*kw*C) tap-major

    # ---- tiling --------------------------------------------------------------
    # Round tile_m to the dtype's sublane packing (bf16 packs 16 rows / vreg).
    sub = 16 if jnp.dtype(matmul_dtype).itemsize < 4 else 8
    tile_m = _round_up(min(tile_m, max(M, sub)), sub)
    if M > sub:
        # Keep >= 2 grid steps so "parallel" can shard across v7x's 2 TCs.
        tile_m = min(tile_m, _round_up(pl.cdiv(M, 2), sub))
    M_pad = _round_up(M, tile_m)
    n_tiles = M_pad // tile_m
    Fp = _round_up(max(F, 128), 128)          # MXU / operand lane width only

    # Zero pad rows contribute 0 to the BN sums; divide by the true M below.
    patches = jnp.pad(patches, ((0, M_pad - M), (0, 0)))

    # weight (F, C, kh, kw) -> (kh, kw, C, F) -> (K, Fp), matching patch order.
    w_mat = jnp.transpose(weight, (2, 3, 1, 0)).reshape(K, F)
    w_mat = jnp.pad(w_mat, ((0, 0), (0, Fp - F))).astype(matmul_dtype)

    if bias is None:
        bias = jnp.zeros((F,), jnp.float32)

    # ---- pass 1 (stats) + fold into a single per-channel scale/shift --------
    if with_bn:
        sums, sqs = pl.pallas_call(
            _conv_stats_kernel,
            out_shape=(jax.ShapeDtypeStruct((n_tiles, 1, Fp), jnp.float32),
                       jax.ShapeDtypeStruct((n_tiles, 1, Fp), jnp.float32)),
            grid=(n_tiles,),
            in_specs=[
                pl.BlockSpec((tile_m, K), lambda i: (i, 0)),
                pl.BlockSpec((K, Fp), lambda i: (0, 0)),
            ],
            out_specs=(
                pl.BlockSpec((1, 1, Fp), lambda i: (i, 0, 0)),
                pl.BlockSpec((1, 1, Fp), lambda i: (i, 0, 0)),
            ),
            compiler_params=pltpu.CompilerParams(
                dimension_semantics=("parallel",)),
        )(patches, w_mat)

        # NOTE: var = E[y^2] - E[y]^2 in f32; fine for conv outputs with modest
        # |mean|/std.  For extreme cases, switch to a Welford-style combine.
        mean = jnp.sum(sums, axis=(0, 1))[:F] / M
        var = jnp.maximum(jnp.sum(sqs, axis=(0, 1))[:F] / M - mean * mean, 0.0)
        scale = gamma.astype(jnp.float32) * jax.lax.rsqrt(var + eps)
        # conv bias cancels exactly in (y - mean); it is never added.
        shift = beta.astype(jnp.float32) - mean * scale
    else:
        scale = jnp.ones((F,), jnp.float32)
        shift = bias.astype(jnp.float32)

    scale = scale.reshape(1, F)
    shift = shift.reshape(1, F)

    # ---- pass 2: recompute conv matmul + fused scale/shift + ReLU -----------
    out_flat = pl.pallas_call(
        functools.partial(_conv_scale_shift_relu_kernel, n_valid=F),
        out_shape=jax.ShapeDtypeStruct((M_pad, F), jnp.float32),
        grid=(n_tiles,),
        in_specs=[
            pl.BlockSpec((tile_m, K), lambda i: (i, 0)),
            pl.BlockSpec((K, Fp), lambda i: (0, 0)),
            pl.BlockSpec((1, F), lambda i: (0, 0)),
            pl.BlockSpec((1, F), lambda i: (0, 0)),
        ],
        out_specs=pl.BlockSpec((tile_m, F), lambda i: (i, 0)),
        compiler_params=pltpu.CompilerParams(
            dimension_semantics=("parallel",)),
    )(patches, w_mat, scale, shift)

    # (M_pad, F) -> slice pad rows -> (N, Ho, Wo, F) -> NCHW (module contract).
    out = out_flat[:M].reshape(N, H_out, W_out, F).transpose(0, 3, 1, 2)
    return out


# ---------------------------------------------------------------------------
# Pure-JAX reference for sanity checks
# ---------------------------------------------------------------------------
def _reference(x, weight, bias, gamma, beta, *, stride, padding, dilation,
               with_bn, eps):
    y = jax.lax.conv_general_dilated(
        x, weight,
        window_strides=(stride, stride),
        padding=[(padding, padding), (padding, padding)],
        rhs_dilation=(dilation, dilation),
        dimension_numbers=("NCHW", "OIHW", "NCHW"),
        precision=jax.lax.Precision.HIGHEST,
    )
    if bias is not None:
        y = y + bias.reshape(1, -1, 1, 1)
    if with_bn:
        mean = jnp.mean(y, axis=(0, 2, 3), keepdims=True)
        var = jnp.mean((y - mean) ** 2, axis=(0, 2, 3), keepdims=True)
        y = (y - mean) * jax.lax.rsqrt(var + eps)
        y = y * gamma.reshape(1, -1, 1, 1) + beta.reshape(1, -1, 1, 1)
    return jnp.maximum(y, 0.0)


if __name__ == "__main__":
    # Module config: Conv2DBatchNormRelu(in_channels=4, n_filters=8, k_size=3,
    #                                    stride=1, padding=1, bias=True, with_bn=True)
    N, C_in, H, W = 2, 4, 16, 16
    F, k, stride, padding, dilation = 8, 3, 1, 1, 1

    key = jax.random.PRNGKey(0)
    kx, kw_, kb, kg, kbt = jax.random.split(key, 5)

    x = jax.random.normal(kx, (N, C_in, H, W), dtype=jnp.float32)
    weight = jax.random.normal(kw_, (F, C_in, k, k), dtype=jnp.float32) * 0.1
    bias = jax.random.normal(kb, (F,), dtype=jnp.float32) * 0.1
    gamma = 1.0 + 0.3 * jax.random.normal(kg, (F,), dtype=jnp.float32)
    beta = 0.1 * jax.random.normal(kbt, (F,), dtype=jnp.float32)

    common = dict(stride=stride, padding=padding, dilation=dilation, eps=1e-5)

    # 1) f32 MXU path, with BN (tight check vs f32 reference).
    out_f32 = jax.block_until_ready(
        conv2d_batchnorm_relu(x, weight, bias, gamma, beta, with_bn=True,
                              matmul_dtype=jnp.float32, **common))
    ref = _reference(x, weight, bias, gamma, beta, with_bn=True, **common)
    assert out_f32.shape == (N, F, H, W), out_f32.shape
    assert jnp.allclose(out_f32, ref, atol=5e-3, rtol=5e-3), \
        float(jnp.max(jnp.abs(out_f32 - ref)))

    # 2) default bf16 MXU path (v6e/v7x fast path), checked against a reference
    #    fed the same bf16-rounded operands (apples-to-apples).
    xb = x.astype(jnp.bfloat16).astype(jnp.float32)
    wb = weight.astype(jnp.bfloat16).astype(jnp.float32)
    out_bf16 = jax.block_until_ready(
        conv2d_batchnorm_relu(x, weight, bias, gamma, beta, with_bn=True,
                              **common))
    ref_bf16 = _reference(xb, wb, bias, gamma, beta, with_bn=True, **common)
    assert jnp.allclose(out_bf16, ref_bf16, atol=2e-3, rtol=2e-3), \
        float(jnp.max(jnp.abs(out_bf16 - ref_bf16)))

    # 3) no-BN path (conv + bias + ReLU) — stats pass is skipped entirely.
    out_nobn = jax.block_until_ready(
        conv2d_batchnorm_relu(x, weight, bias, gamma, beta, with_bn=False,
                              matmul_dtype=jnp.float32, **common))
    ref_nobn = _reference(x, weight, bias, gamma, beta, with_bn=False, **common)
    assert jnp.allclose(out_nobn, ref_nobn, atol=5e-3, rtol=5e-3), \
        float(jnp.max(jnp.abs(out_nobn - ref_nobn)))

    print("KERNEL_OK")
</pallas_src>

<mosaic_0001>
module attributes {stable_mosaic.version = 11 : i64} {
  func.func @_conv_stats_kernel(%arg0: i32, %arg1: memref<256x36xf32, #tpu.memory_space<vmem>>, %arg2: memref<36x128xf32, #tpu.memory_space<vmem>>, %arg3: memref<1x1x128xf32, #tpu.memory_space<vmem>>, %arg4: memref<1x1x128xf32, #tpu.memory_space<vmem>>) attributes {dimension_semantics = [#tpu.dimension_semantics<parallel>], iteration_bounds = array<i64: 2>, scalar_prefetch = 0 : i64, scratch_operands = 0 : i64, tpu.core_type = #tpu.core_type<tc>, window_params = [{transform_indices = @transform_0, window_bounds = array<i64: 256, 36>}, {pipeline_mode = #tpu.pipeline_mode<synchronous>, transform_indices = @transform_1, window_bounds = array<i64: 36, 128>}, {transform_indices = @transform_2, window_bounds = array<i64: 1, 1, 128>}, {transform_indices = @transform_3, window_bounds = array<i64: 1, 1, 128>}]} {
    %c0 = arith.constant 0 : index
    %c0_0 = arith.constant 0 : index
    %0 = vector.load %arg1[%c0, %c0_0] : memref<256x36xf32, #tpu.memory_space<vmem>>, vector<256x36xf32>
    %c0_1 = arith.constant 0 : index
    %c0_2 = arith.constant 0 : index
    %1 = vector.load %arg2[%c0_1, %c0_2] : memref<36x128xf32, #tpu.memory_space<vmem>>, vector<36x128xf32>
    %cst = arith.constant dense<0.000000e+00> : vector<256x128xf32>
    %2 = tpu.matmul %0, %1, %cst {dimension_numbers = #tpu.dot_dimension_numbers<[1], [0], [0], [1], [0, 0, 1, 1], [], []>} : vector<256x36xf32>, vector<36x128xf32>, vector<256x128xf32> -> vector<256x128xf32>
    %cst_3 = arith.constant dense<0.000000e+00> : vector<128xf32>
    %3 = vector.multi_reduction <add>, %2, %cst_3 [0] : vector<256x128xf32> to vector<128xf32>
    %4 = vector.shape_cast %3 : vector<128xf32> to vector<1x128xf32>
    %c0_4 = arith.constant 0 : index
    %c0_5 = arith.constant 0 : index
    %c0_6 = arith.constant 0 : index
    %5 = vector.load %arg3[%c0_4, %c0_5, %c0_6] : memref<1x1x128xf32, #tpu.memory_space<vmem>>, vector<1x1x128xf32>
    %6 = vector.shape_cast %5 : vector<1x1x128xf32> to vector<1x128xf32>
    %7 = vector.shape_cast %4 : vector<1x128xf32> to vector<1x1x128xf32>
    tpu.vector_store %arg3[%c0_4, %c0_5, %c0_6], %7 {strides = array<i32>} : memref<1x1x128xf32, #tpu.memory_space<vmem>>, vector<1x1x128xf32>,
    %8 = arith.mulf %2, %2 : vector<256x128xf32>
    %cst_7 = arith.constant dense<0.000000e+00> : vector<128xf32>
    %9 = vector.multi_reduction <add>, %8, %cst_7 [0] : vector<256x128xf32> to vector<128xf32>
    %10 = vector.shape_cast %9 : vector<128xf32> to vector<1x128xf32>
    %c0_8 = arith.constant 0 : index
    %c0_9 = arith.constant 0 : index
    %c0_10 = arith.constant 0 : index
    %11 = vector.load %arg4[%c0_8, %c0_9, %c0_10] : memref<1x1x128xf32, #tpu.memory_space<vmem>>, vector<1x1x128xf32>
    %12 = vector.shape_cast %11 : vector<1x1x128xf32> to vector<1x128xf32>
    %13 = vector.shape_cast %10 : vector<1x128xf32> to vector<1x1x128xf32>
    tpu.vector_store %arg4[%c0_8, %c0_9, %c0_10], %13 {strides = array<i32>} : memref<1x1x128xf32, #tpu.memory_space<vmem>>, vector<1x1x128xf32>,
    return
  }
  func.func @transform_0(%arg0: i32) -> (i32, i32) {
    %c0_i32 = arith.constant 0 : i32
    %c0_i32_0 = arith.constant 0 : i32
    return %arg0, %c0_i32 : i32, i32
  }
  func.func @transform_1(%arg0: i32) -> (i32, i32) {
    %c0_i32 = arith.constant 0 : i32
    %c0_i32_0 = arith.constant 0 : i32
    %c0_i32_1 = arith.constant 0 : i32
    return %c0_i32, %c0_i32_0 : i32, i32
  }
  func.func @transform_2(%arg0: i32) -> (i32, i32, i32) {
    %c0_i32 = arith.constant 0 : i32
    %c0_i32_0 = arith.constant 0 : i32
    %c0_i32_1 = arith.constant 0 : i32
    return %arg0, %c0_i32, %c0_i32_0 : i32, i32, i32
  }
  func.func @transform_3(%arg0: i32) -> (i32, i32, i32) {
    %c0_i32 = arith.constant 0 : i32
    %c0_i32_0 = arith.constant 0 : i32
    %c0_i32_1 = arith.constant 0 : i32
    return %arg0, %c0_i32, %c0_i32_0 : i32, i32, i32
  }
}

</mosaic_0001>

<llo_original>
// kernel: tpu_custom_call.1
$region0: #{tpu_custom_call.1}
  #allocation0 [shape = 'u32[]', space=smem, size = 0x4, offset = 0x4, fixed_abs, tag = 'smem constant byte address 0x4 - core index']
  #allocation1 [shape = 'u32[144,128]{1,0:T(1,128)}', space=vmem, size = 0x12000, scoped, tag = 'internal scratch']
  %s0 = inlined_call_operand.vmem [shape: f32[512,36], index: 0, kind: input, shape index: {}]
  %s1 = inlined_call_operand.vmem [shape: f32[36,128], index: 1, kind: input, shape index: {}]
  %s2 = inlined_call_operand.hbm [shape: f32[2,1,128], index: 2, kind: output, shape index: {0}]
  %s3 = inlined_call_operand.hbm [shape: f32[2,1,128], index: 3, kind: output, shape index: {1}]
  %4 = xla_tuple %s2, %s3
  %s5 = sld [smem:[#allocation0]]
  $region49: #{tpu_custom_call.1} parent=0
    _
  %s7 = ssub.s32 1, %s5
  %s8 = scalar_select 0, %s7, %s5
  $region1: #{tpu_custom_call.1} parent=0
    #allocation2 [shape = 'u8[1024]{0}', space=vmem, size = 0x400, scoped, tag = 'output window, operand 0']
    #allocation3 [shape = 's32[2]{0}', space=sflag, size = 0x8, scoped, tag = 'scoped memory for tpu_custom_call.1']
    #allocation4 [shape = 'u8[1024]{0}', space=vmem, size = 0x400, scoped, tag = 'output window, operand 1']
    #allocation5 [shape = 's32[2]{0}', space=sflag, size = 0x8, scoped, tag = 'scoped memory for tpu_custom_call.1']
    %9 = vsyncpa [#allocation3], 0
    %s10 = scalar_lea.sflag [#allocation3], 1
    %11 = vsyncpa %s10, 0
    %12 = vsyncpa [#allocation5], 0
    %s13 = scalar_lea.sflag [#allocation5], 1
    %14 = vsyncpa %s13, 0
    loop: start=0, step=1, limit=4
    $region2: #{tpu_custom_call.1} parent=1 // loop_pre_header
      _
    $region3: #{tpu_custom_call.1} parent=1 // loop_header
      %s16 = sphi 0, %s20
      %p17 = scmp.ge.s32.totalorder %s16, 4
      %s26 = sphi 0, %s28
      %s29 = sphi 0, %s26
      %s30 = sphi 0, %s29
      %s46 = sphi 0, %s30
      %s50 = sphi 0, %s50
      %s52 = sphi 0, %s50
      %s53 = sphi 0, %s52
      %s67 = sphi 0, %s53
      %s73 = sphi 0, %s75
      %s76 = sphi 0, %s73
      %s77 = sphi 0, %s76
      %s93 = sphi 0, %s77
      %s99 = sphi 0, %s101
      %s102 = sphi 0, %s99
      %s103 = sphi 0, %s102
      %s119 = sphi 0, %s103
    $region4: #{tpu_custom_call.1} parent=1 // loop_header_branch
      %19 = sbr.rel (%p17) target = $region8
    $region5: #{tpu_custom_call.1} parent=1 // loop_body
      %s21 = ssub.s32 %s16, 1
      %s22 = ssub.s32 %s16, 2
      %s23 = sadd.s32 %s16, 1
      %s24 = ssub.s32 %s16, %s23
      %p25 = scmp.eq.s32.totalorder %s24, 0
      %s27 = sadd.s32 %s26, 1
      %s28 = scalar_select %p25, %s26, %s27
      %p31 = pneg %p25
      %p32 = scmp.eq.s32.totalorder %s16, 1
      %p33 = por %p31, %p32
      %p34 = scmp.ne.s32.totalorder %s26, %s29
      %p35 = scmp.eq.s32.totalorder %s16, 0
      %p36 = por %p34, %p35
      %p37 = scmp.ne.s32.totalorder %s26, %s29
      %p38 = scmp.eq.s32.totalorder %s21, 1
      %p39 = por %p37, %p38
      %p40 = scmp.ne.s32.totalorder %s29, %s30
      %p41 = scmp.eq.s32.totalorder %s21, 0
      %p42 = por %p40, %p41
      %p43 = scmp.ne.s32.totalorder %s29, %s30
      %p44 = scmp.eq.s32.totalorder %s22, 1
      %p45 = por %p43, %p44
      %p47 = scmp.ne.s32.totalorder %s30, %s46
      %p48 = scmp.eq.s32.totalorder %s22, 0
      %p49 = por %p47, %p48
      %s51 = sadd.s32 %s50, 1
      %p54 = scmp.eq.s32.totalorder %s16, 1
      %p55 = scmp.ne.s32.totalorder %s50, %s52
      %p56 = scmp.eq.s32.totalorder %s16, 0
      %p57 = por %p55, %p56
      %p58 = scmp.ne.s32.totalorder %s50, %s52
      %p59 = scmp.eq.s32.totalorder %s21, 1
      %p60 = por %p58, %p59
      %p61 = scmp.ne.s32.totalorder %s52, %s53
      %p62 = scmp.eq.s32.totalorder %s21, 0
      %p63 = por %p61, %p62
      %p64 = scmp.ne.s32.totalorder %s52, %s53
      %p65 = scmp.eq.s32.totalorder %s22, 1
      %p66 = por %p64, %p65
      %p68 = scmp.ne.s32.totalorder %s53, %s67
      %p69 = scmp.eq.s32.totalorder %s22, 0
      %p70 = por %p68, %p69
      %s71 = ssub.s32 %s16, %s23
      %p72 = scmp.eq.s32.totalorder %s71, 0
      %s74 = sadd.s32 %s73, 1
      %s75 = scalar_select %p72, %s73, %s74
      %p78 = pneg %p72
      %p79 = scmp.eq.s32.totalorder %s16, 1
      %p80 = por %p78, %p79
      %p81 = scmp.ne.s32.totalorder %s73, %s76
      %p82 = scmp.eq.s32.totalorder %s16, 0
      %p83 = por %p81, %p82
      %p84 = scmp.ne.s32.totalorder %s73, %s76
      %p85 = scmp.eq.s32.totalorder %s21, 1
      %p86 = por %p84, %p85
      %p87 = scmp.ne.s32.totalorder %s76, %s77
      %p88 = scmp.eq.s32.totalorder %s21, 0
      %p89 = por %p87, %p88
      %p90 = scmp.ne.s32.totalorder %s76, %s77
      %p91 = scmp.eq.s32.totalorder %s22, 1
      %p92 = por %p90, %p91
      %p94 = scmp.ne.s32.totalorder %s77, %s93
      %p95 = scmp.eq.s32.totalorder %s22, 0
      %p96 = por %p94, %p95
      %s97 = ssub.s32 %s16, %s23
      %p98 = scmp.eq.s32.totalorder %s97, 0
      %s100 = sadd.s32 %s99, 1
      %s101 = scalar_select %p98, %s99, %s100
      %p104 = pneg %p98
      %p105 = scmp.eq.s32.totalorder %s16, 1
      %p106 = por %p104, %p105
      %p107 = scmp.ne.s32.totalorder %s99, %s102
      %p108 = scmp.eq.s32.totalorder %s16, 0
      %p109 = por %p107, %p108
      %p110 = scmp.ne.s32.totalorder %s99, %s102
      %p111 = scmp.eq.s32.totalorder %s21, 1
      %p112 = por %p110, %p111
      %p113 = scmp.ne.s32.totalorder %s102, %s103
      %p114 = scmp.eq.s32.totalorder %s21, 0
      %p115 = por %p113, %p114
      %p116 = scmp.ne.s32.totalorder %s102, %s103
      %p117 = scmp.eq.s32.totalorder %s22, 1
      %p118 = por %p116, %p117
      %p120 = scmp.ne.s32.totalorder %s103, %s119
      %p121 = scmp.eq.s32.totalorder %s22, 0
      %p122 = por %p120, %p121
      %p123 = scmp.le.s32.totalorder 1, %s16
      %p124 = scmp.lt.s32.totalorder %s16, 3
      %p125 = pnand %p123, %p124
      %p126 = pneg %p125
      // Predicated region
      $region9: #{tpu_custom_call.1} parent=5 // pred_check
        _
      $region10: #{tpu_custom_call.1} parent=5 // pred_check_branch
        %128 = sbr.rel (%p125) target = $region12
      $region11: #{tpu_custom_call.1} parent=5 // pred_region
        %s129 = ssub.s32 %s16, 1
        // Predicated region
        $region13: #{tpu_custom_call.1} parent=11 // pred_check
          %p130 = pneg %p63
        $region14: #{tpu_custom_call.1} parent=11 // pred_check_branch
          %132 = sbr.rel (%p130) target = $region16
        $region15: #{tpu_custom_call.1} parent=11 // pred_region
          _
        $region16: #{tpu_custom_call.1} parent=11 // pred_fallthru
          _
      $region12: #{tpu_custom_call.1} parent=5 // pred_fallthru
        _
      %p133 = scmp.lt.s32.totalorder %s16, 2
      // Predicated region
      $region17: #{tpu_custom_call.1} parent=5 // pred_check
        %p134 = pneg %p133
      $region18: #{tpu_custom_call.1} parent=5 // pred_check_branch
        %136 = sbr.rel (%p134) target = $region20
      $region19: #{tpu_custom_call.1} parent=5 // pred_region
        // Predicated region
        $region21: #{tpu_custom_call.1} parent=19 // pred_check
          %p137 = pneg %p36
        $region22: #{tpu_custom_call.1} parent=19 // pred_check_branch
          %139 = sbr.rel (%p137) target = $region24
        $region23: #{tpu_custom_call.1} parent=19 // pred_region
          %s140 = smul.u32 32, %s16
          %p141 = scmp.lt.s32.totalorder %s140, 63
          %s142 = scalar_select %p141, %s140, 63
          %s143 = smul.addr %s142, 8
          %s144 = scalar_lea.vmem %s0, %s143
          %s145 = smul.u32 32, %s16
        $region24: #{tpu_custom_call.1} parent=19 // pred_fallthru
          _
      $region20: #{tpu_custom_call.1} parent=5 // pred_fallthru
        _
      %p146 = scmp.le.s32.totalorder 1, %s16
      %p147 = scmp.lt.s32.totalorder %s16, 3
      %p148 = pnand %p146, %p147
      %p149 = pneg %p148
      // Predicated region
      $region25: #{tpu_custom_call.1} parent=5 // pred_check
        _
      $region26: #{tpu_custom_call.1} parent=5 // pred_check_branch
        %151 = sbr.rel (%p148) target = $region28
      $region27: #{tpu_custom_call.1} parent=5 // pred_region
        %s152 = ssub.s32 %s16, 1
        %s153 = smul.u32 32, %s21
        %p154 = scmp.lt.s32.totalorder %s153, 63
        %s155 = scalar_select %p154, %s153, 63
        %s156 = smul.addr %s155, 8
        %s157 = scalar_lea.vmem %s0, %s156
        %p158 = pneg %p42
        %p159 = pneg %p39
        %p160 = pneg %p63
        %p161 = pneg %p60
        %p162 = pneg %p89
        %p163 = pneg %p86
        %s164 = sand.u32 %s76, 1
        %s165 = scalar_lea.sflag [#allocation3], %s164
        %s166 = sand.u32 %s76, 1
        %s167 = scalar_lea.vmem [#allocation2], %s166
        %p168 = pneg %p115
        %p169 = pneg %p112
        %s170 = sand.u32 %s102, 1
        %s171 = scalar_lea.sflag [#allocation5], %s170
        %s172 = sand.u32 %s102, 1
        %s173 = scalar_lea.vmem [#allocation4], %s172
        %s174 = smul.u32 32, %s21
        %p175 = scmp.lt.s32.totalorder %s174, 63
        %s176 = scalar_select %p175, %s174, 63
        %s177 = smul.addr %s176, 8
        %s178 = scalar_lea.vmem %s0, %s177
        %s179 = smul.u32 32, %s21
        %v180 = vld [vmem:[%s178] sm:$0xff]
        %v181 = vld [vmem:[%s178 + $0x8] sm:$0xff]
        %v182 = vld [vmem:[%s178 + $0x10] sm:$0xff]
        %v183 = vld [vmem:[%s178 + $0x18] sm:$0xff]
        %v184 = vld [vmem:[%s178 + $0x20] sm:$0xff]
        %v185 = vld [vmem:[%s178 + $0x28] sm:$0xff]
        %v186 = vld [vmem:[%s178 + $0x30] sm:$0xff]
        %v187 = vld [vmem:[%s178 + $0x38] sm:$0xff]
        %v188 = vld [vmem:[%s178 + $0x40] sm:$0xff]
        %v189 = vld [vmem:[%s178 + $0x48] sm:$0xff]
        %v190 = vld [vmem:[%s178 + $0x50] sm:$0xff]
        %v191 = vld [vmem:[%s178 + $0x58] sm:$0xff]
        %v192 = vld [vmem:[%s178 + $0x60] sm:$0xff]
        %v193 = vld [vmem:[%s178 + $0x68] sm:$0xff]
        %v194 = vld [vmem:[%s178 + $0x70] sm:$0xff]
        %v195 = vld [vmem:[%s178 + $0x78] sm:$0xff]
        %v196 = vld [vmem:[%s178 + $0x80] sm:$0xff]
        %v197 = vld [vmem:[%s178 + $0x88] sm:$0xff]
        %v198 = vld [vmem:[%s178 + $0x90] sm:$0xff]
        %v199 = vld [vmem:[%s178 + $0x98] sm:$0xff]
        %v200 = vld [vmem:[%s178 + $0xa0] sm:$0xff]
        %v201 = vld [vmem:[%s178 + $0xa8] sm:$0xff]
        %v202 = vld [vmem:[%s178 + $0xb0] sm:$0xff]
        %v203 = vld [vmem:[%s178 + $0xb8] sm:$0xff]
        %v204 = vld [vmem:[%s178 + $0xc0] sm:$0xff]
        %v205 = vld [vmem:[%s178 + $0xc8] sm:$0xff]
        %v206 = vld [vmem:[%s178 + $0xd0] sm:$0xff]
        %v207 = vld [vmem:[%s178 + $0xd8] sm:$0xff]
        %v208 = vld [vmem:[%s178 + $0xe0] sm:$0xff]
        %v209 = vld [vmem:[%s178 + $0xe8] sm:$0xff]
        %v210 = vld [vmem:[%s178 + $0xf0] sm:$0xff]
        %v211 = vld [vmem:[%s178 + $0xf8] sm:$0xff]
        %v212 = vld [vmem:[%s1] sm:$0xff]
        %v213 = vld [vmem:[%s1 + $0x8] sm:$0xff]
        %v214 = vld [vmem:[%s1 + $0x10] sm:$0xff]
        %v215 = vld [vmem:[%s1 + $0x18] sm:$0xff]
        %v216 = vld [vmem:[%s1 + $0x20] sm:$0xf]
        %vm217 = vcmask 293888
        %v219 = vsel %vm217, %v180, 0
        %v222 = vsel %vm217, %v181, 0
        %v225 = vsel %vm217, %v182, 0
        %v228 = vsel %vm217, %v183, 0
        %v231 = vsel %vm217, %v184, 0
        %v234 = vsel %vm217, %v185, 0
        %v237 = vsel %vm217, %v186, 0
        %v240 = vsel %vm217, %v187, 0
        %v243 = vsel %vm217, %v188, 0
        %v246 = vsel %vm217, %v189, 0
        %v249 = vsel %vm217, %v190, 0
        %v252 = vsel %vm217, %v191, 0
        %v255 = vsel %vm217, %v192, 0
        %v258 = vsel %vm217, %v193, 0
        %v261 = vsel %vm217, %v194, 0
        %v264 = vsel %vm217, %v195, 0
        %v267 = vsel %vm217, %v196, 0
        %v270 = vsel %vm217, %v197, 0
        %v273 = vsel %vm217, %v198, 0
        %v276 = vsel %vm217, %v199, 0
        %v279 = vsel %vm217, %v200, 0
        %v282 = vsel %vm217, %v201, 0
        %v285 = vsel %vm217, %v202, 0
        %v288 = vsel %vm217, %v203, 0
        %v291 = vsel %vm217, %v204, 0
        %v294 = vsel %vm217, %v205, 0
        %v297 = vsel %vm217, %v206, 0
        %v300 = vsel %vm217, %v207, 0
        %v303 = vsel %vm217, %v208, 0
        %v306 = vsel %vm217, %v209, 0
        %v309 = vsel %vm217, %v210, 0
        %v312 = vsel %vm217, %v211, 0
        %vm314 = vcmask 1043456
        %v316 = vsel %vm314, %v216, 0
        %318 = vmatprep.subr.mxu0 0.0
        %319 = vmatpush1.msra.mxu0 %v212
        %320 = vmatprep.subr.mxu0 0.0
        %321 = vmatpush1.msra.mxu0 %v213
        %322 = vmatprep.subr.mxu0 0.0
        %323 = vmatpush1.msra.mxu0 %v214
        %324 = vmatprep.subr.mxu0 0.0
        %325 = vmatpush1.msra.mxu0 %v215
        %326 = vmatprep.subr.mxu0 0.0
        %327 = vmatpush1.msra.mxu0 %v316
        %328 = vmatprep.subr.mxu0 0.0
        %329 = vmatpush1.msra.mxu0 0.0
        %330 = vmatprep.subr.mxu0 0.0
        %331 = vmatpush1.msra.mxu0 0.0
        %332 = vmatprep.subr.mxu0 0.0
        %333 = vmatpush1.msra.mxu0 0.0
        %334 = vmatprep.subr.mxu0 0.0
        %335 = vmatpush1.msra.mxu0 0.0
        %336 = vmatprep.subr.mxu0 0.0
        %337 = vmatpush1.msra.mxu0 0.0
        %338 = vmatprep.subr.mxu0 0.0
        %339 = vmatpush1.msra.mxu0 0.0
        %340 = vmatprep.subr.mxu0 0.0
        %341 = vmatpush1.msra.mxu0 0.0
        %342 = vmatprep.subr.mxu0 0.0
        %343 = vmatpush1.msra.mxu0 0.0
        %344 = vmatprep.subr.mxu0 0.0
        %345 = vmatpush1.msra.mxu0 0.0
        %346 = vmatprep.subr.mxu0 0.0
        %347 = vmatpush1.msra.mxu0 0.0
        %348 = vmatprep.subr.mxu0 0.0
        %349 = vmatpush1.msra.mxu0 0.0
        %350 = vmatprep.subr.mxu0 0.0
        %351 = vmatpush1.msra.mxu0 0.0
        %352 = vmatprep.subr.mxu0 0.0
        %353 = vmatpush1.msra.mxu0 0.0
        %354 = vmatprep.subr.mxu0 0.0
        %355 = vmatpush1.msra.mxu0 0.0
        %356 = vmatprep.subr.mxu0 0.0
        %357 = vmatpush1.msra.mxu0 0.0
        %358 = vmatprep.subr.mxu0 0.0
        %359 = vmatpush1.msra.mxu0 0.0
        %360 = vmatprep.subr.mxu0 0.0
        %361 = vmatpush1.msra.mxu0 0.0
        %362 = vmatprep.subr.mxu0 0.0
        %363 = vmatpush1.msra.mxu0 0.0
        %364 = vmatprep.subr.mxu0 0.0
        %365 = vmatpush1.msra.mxu0 0.0
        %366 = vmatprep.subr.mxu0 0.0
        %367 = vmatpush1.msra.mxu0 0.0
        %368 = vmatprep.subr.mxu0 0.0
        %369 = vmatpush1.msra.mxu0 0.0
        %370 = vmatprep.subr.mxu0 0.0
        %371 = vmatpush1.msra.mxu0 0.0
        %372 = vmatprep.subr.mxu0 0.0
        %373 = vmatpush1.msra.mxu0 0.0
        %374 = vmatprep.subr.mxu0 0.0
        %375 = vmatpush1.msra.mxu0 0.0
        %376 = vmatprep.subr.mxu0 0.0
        %377 = vmatpush1.msra.mxu0 0.0
        %378 = vmatprep.subr.mxu0 0.0
        %379 = vmatpush1.msra.mxu0 0.0
        %380 = vmatprep.subr.mxu0 0.0
        %381 = vmatpush1.msra.mxu0 0.0
        %382 = vmatprep.mubr.f32.mxu0 0.0
        %383 = vmatmul.mubr.f32.gmra.mrb[0].mxu0 %v219
        %v384 = vpop.f32.mrb[0].mxu0
        %v385 = vadd.f32 0.0, %v384
        %v386 = vpop.f32.mrb[0].mxu0
        %387 = vmatprep.mubr.f32.mxu0 0.0
        %388 = vmatmul.mubr.f32.gmra.mrb[0].mxu0 %v222
        %v389 = vpop.f32.mrb[0].mxu0
        %v390 = vadd.f32 0.0, %v389
        %v391 = vpop.f32.mrb[0].mxu0
        %392 = vmatprep.mubr.f32.mxu0 0.0
        %393 = vmatmul.mubr.f32.gmra.mrb[0].mxu0 %v225
        %v394 = vpop.f32.mrb[0].mxu0
        %v395 = vadd.f32 0.0, %v394
        %v396 = vpop.f32.mrb[0].mxu0
        %397 = vmatprep.mubr.f32.mxu0 0.0
        %398 = vmatmul.mubr.f32.gmra.mrb[0].mxu0 %v228
        %v399 = vpop.f32.mrb[0].mxu0
        %v400 = vadd.f32 0.0, %v399
        %v401 = vpop.f32.mrb[0].mxu0
        %402 = vmatprep.mubr.f32.mxu0 0.0
        %403 = vmatmul.mubr.f32.gmra.mrb[0].mxu0 %v231
        %v404 = vpop.f32.mrb[0].mxu0
        %v405 = vadd.f32 0.0, %v404
        %v406 = vpop.f32.mrb[0].mxu0
        %407 = vmatprep.mubr.f32.mxu0 0.0
        %408 = vmatmul.mubr.f32.gmra.mrb[0].mxu0 %v234
        %v409 = vpop.f32.mrb[0].mxu0
        %v410 = vadd.f32 0.0, %v409
        %v411 = vpop.f32.mrb[0].mxu0
        %412 = vmatprep.mubr.f32.mxu0 0.0
        %413 = vmatmul.mubr.f32.gmra.mrb[0].mxu0 %v237
        %v414 = vpop.f32.mrb[0].mxu0
        %v415 = vadd.f32 0.0, %v414
        %v416 = vpop.f32.mrb[0].mxu0
        %417 = vmatprep.mubr.f32.mxu0 0.0
        %418 = vmatmul.mubr.f32.gmra.mrb[0].mxu0 %v240
        %v419 = vpop.f32.mrb[0].mxu0
        %v420 = vadd.f32 0.0, %v419
        %v421 = vpop.f32.mrb[0].mxu0
        %422 = vmatprep.mubr.f32.mxu0 0.0
        %423 = vmatmul.mubr.f32.gmra.mrb[0].mxu0 %v243
        %v424 = vpop.f32.mrb[0].mxu0
        %v425 = vadd.f32 0.0, %v424
        %v426 = vpop.f32.mrb[0].mxu0
        %427 = vmatprep.mubr.f32.mxu0 0.0
        %428 = vmatmul.mubr.f32.gmra.mrb[0].mxu0 %v246
        %v429 = vpop.f32.mrb[0].mxu0
        %v430 = vadd.f32 0.0, %v429
        %v431 = vpop.f32.mrb[0].mxu0
        %432 = vmatprep.mubr.f32.mxu0 0.0
        %433 = vmatmul.mubr.f32.gmra.mrb[0].mxu0 %v249
        %v434 = vpop.f32.mrb[0].mxu0
        %v435 = vadd.f32 0.0, %v434
        %v436 = vpop.f32.mrb[0].mxu0
        %437 = vmatprep.mubr.f32.mxu0 0.0
        %438 = vmatmul.mubr.f32.gmra.mrb[0].mxu0 %v252
        %v439 = vpop.f32.mrb[0].mxu0
        %v440 = vadd.f32 0.0, %v439
        %v441 = vpop.f32.mrb[0].mxu0
        %442 = vmatprep.mubr.f32.mxu0 0.0
        %443 = vmatmul.mubr.f32.gmra.mrb[0].mxu0 %v255
        %v444 = vpop.f32.mrb[0].mxu0
        %v445 = vadd.f32 0.0, %v444
        %v446 = vpop.f32.mrb[0].mxu0
        %447 = vmatprep.mubr.f32.mxu0 0.0
        %448 = vmatmul.mubr.f32.gmra.mrb[0].mxu0 %v258
        %v449 = vpop.f32.mrb[0].mxu0
        %v450 = vadd.f32 0.0, %v449
        %v451 = vpop.f32.mrb[0].mxu0
        %452 = vmatprep.mubr.f32.mxu0 0.0
        %453 = vmatmul.mubr.f32.gmra.mrb[0].mxu0 %v261
        %v454 = vpop.f32.mrb[0].mxu0
        %v455 = vadd.f32 0.0, %v454
        %v456 = vpop.f32.mrb[0].mxu0
        %457 = vmatprep.mubr.f32.mxu0 0.0
        %458 = vmatmul.mubr.f32.gmra.mrb[0].mxu0 %v264
        %v459 = vpop.f32.mrb[0].mxu0
        %v460 = vadd.f32 0.0, %v459
        %v461 = vpop.f32.mrb[0].mxu0
        %462 = vmatprep.mubr.f32.mxu0 0.0
        %463 = vmatmul.mubr.f32.gmra.mrb[0].mxu0 %v267
        %v464 = vpop.f32.mrb[0].mxu0
        %v465 = vadd.f32 0.0, %v464
        %v466 = vpop.f32.mrb[0].mxu0
        %467 = vmatprep.mubr.f32.mxu0 0.0
        %468 = vmatmul.mubr.f32.gmra.mrb[0].mxu0 %v270
        %v469 = vpop.f32.mrb[0].mxu0
        %v470 = vadd.f32 0.0, %v469
        %v471 = vpop.f32.mrb[0].mxu0
        %472 = vmatprep.mubr.f32.mxu0 0.0
        %473 = vmatmul.mubr.f32.gmra.mrb[0].mxu0 %v273
        %v474 = vpop.f32.mrb[0].mxu0
        %v475 = vadd.f32 0.0, %v474
        %v476 = vpop.f32.mrb[0].mxu0
        %477 = vmatprep.mubr.f32.mxu0 0.0
        %478 = vmatmul.mubr.f32.gmra.mrb[0].mxu0 %v276
        %v479 = vpop.f32.mrb[0].mxu0
        %v480 = vadd.f32 0.0, %v479
        %v481 = vpop.f32.mrb[0].mxu0
        %482 = vmatprep.mubr.f32.mxu0 0.0
        %483 = vmatmul.mubr.f32.gmra.mrb[0].mxu0 %v279
        %v484 = vpop.f32.mrb[0].mxu0
        %v485 = vadd.f32 0.0, %v484
        %v486 = vpop.f32.mrb[0].mxu0
        %487 = vmatprep.mubr.f32.mxu0 0.0
        %488 = vmatmul.mubr.f32.gmra.mrb[0].mxu0 %v282
        %v489 = vpop.f32.mrb[0].mxu0
        %v490 = vadd.f32 0.0, %v489
        %v491 = vpop.f32.mrb[0].mxu0
        %492 = vmatprep.mubr.f32.mxu0 0.0
        %493 = vmatmul.mubr.f32.gmra.mrb[0].mxu0 %v285
        %v494 = vpop.f32.mrb[0].mxu0
        %v495 = vadd.f32 0.0, %v494
        %v496 = vpop.f32.mrb[0].mxu0
        %497 = vmatprep.mubr.f32.mxu0 0.0
        %498 = vmatmul.mubr.f32.gmra.mrb[0].mxu0 %v288
        %v499 = vpop.f32.mrb[0].mxu0
        %v500 = vadd.f32 0.0, %v499
        %v501 = vpop.f32.mrb[0].mxu0
        %502 = vmatprep.mubr.f32.mxu0 0.0
        %503 = vmatmul.mubr.f32.gmra.mrb[0].mxu0 %v291
        %v504 = vpop.f32.mrb[0].mxu0
        %v505 = vadd.f32 0.0, %v504
        %v506 = vpop.f32.mrb[0].mxu0
        %507 = vmatprep.mubr.f32.mxu0 0.0
        %508 = vmatmul.mubr.f32.gmra.mrb[0].mxu0 %v294
        %v509 = vpop.f32.mrb[0].mxu0
        %v510 = vadd.f32 0.0, %v509
        %v511 = vpop.f32.mrb[0].mxu0
        %512 = vmatprep.mubr.f32.mxu0 0.0
        %513 = vmatmul.mubr.f32.gmra.mrb[0].mxu0 %v297
        %v514 = vpop.f32.mrb[0].mxu0
        %v515 = vadd.f32 0.0, %v514
        %v516 = vpop.f32.mrb[0].mxu0
        %517 = vmatprep.mubr.f32.mxu0 0.0
        %518 = vmatmul.mubr.f32.gmra.mrb[0].mxu0 %v300
        %v519 = vpop.f32.mrb[0].mxu0
        %v520 = vadd.f32 0.0, %v519
        %v521 = vpop.f32.mrb[0].mxu0
        %522 = vmatprep.mubr.f32.mxu0 0.0
        %523 = vmatmul.mubr.f32.gmra.mrb[0].mxu0 %v303
        %v524 = vpop.f32.mrb[0].mxu0
        %v525 = vadd.f32 0.0, %v524
        %v526 = vpop.f32.mrb[0].mxu0
        %527 = vmatprep.mubr.f32.mxu0 0.0
        %528 = vmatmul.mubr.f32.gmra.mrb[0].mxu0 %v306
        %v529 = vpop.f32.mrb[0].mxu0
        %v530 = vadd.f32 0.0, %v529
        %v531 = vpop.f32.mrb[0].mxu0
        %532 = vmatprep.mubr.f32.mxu0 0.0
        %533 = vmatmul.mubr.f32.gmra.mrb[0].mxu0 %v309
        %v534 = vpop.f32.mrb[0].mxu0
        %v535 = vadd.f32 0.0, %v534
        %v536 = vpop.f32.mrb[0].mxu0
        %537 = vmatprep.mubr.f32.mxu0 0.0
        %538 = vmatmul.mubr.f32.gmra.mrb[0].mxu0 %v312
        %v539 = vpop.f32.mrb[0].mxu0
        %v540 = vadd.f32 0.0, %v539
        %v541 = vpop.f32.mrb[0].mxu0
        %542 = vdwg.mxu0
        %v543 = vadd.f32 %v385, %v390
        %v544 = vadd.f32 %v543, %v395
        %v545 = vadd.f32 %v544, %v400
        %v546 = vadd.f32 %v545, %v405
        %v547 = vadd.f32 %v546, %v410
        %v548 = vadd.f32 %v547, %v415
        %v549 = vadd.f32 %v548, %v420
        %v550 = vadd.f32 %v549, %v425
        %v551 = vadd.f32 %v550, %v430
        %v552 = vadd.f32 %v551, %v435
        %v553 = vadd.f32 %v552, %v440
        %v554 = vadd.f32 %v553, %v445
        %v555 = vadd.f32 %v554, %v450
        %v556 = vadd.f32 %v555, %v455
        %v557 = vadd.f32 %v556, %v460
        %v558 = vadd.f32 %v557, %v465
        %v559 = vadd.f32 %v558, %v470
        %v560 = vadd.f32 %v559, %v475
        %v561 = vadd.f32 %v560, %v480
        %v562 = vadd.f32 %v561, %v485
        %v563 = vadd.f32 %v562, %v490
        %v564 = vadd.f32 %v563, %v495
        %v565 = vadd.f32 %v564, %v500
        %v566 = vadd.f32 %v565, %v505
        %v567 = vadd.f32 %v566, %v510
        %v568 = vadd.f32 %v567, %v515
        %v569 = vadd.f32 %v568, %v520
        %v570 = vadd.f32 %v569, %v525
        %v571 = vadd.f32 %v570, %v530
        %v572 = vadd.f32 %v571, %v535
        %v573 = vadd.f32 %v572, %v540
        %v574 = vrot.slane %v573, 4
        %v575 = vadd.f32 %v573, %v574
        %v576 = vrot.slane %v575, 2
        %v577 = vadd.f32 %v575, %v576
        %v578 = vrot.slane %v577, 1
        %v579 = vadd.f32 %v577, %v578
        %580 = vst [vmem:[%s167] sm:$0x1] %v579
        %v581 = vmul.f32 %v385, %v385
        %v582 = vmul.f32 %v390, %v390
        %v583 = vmul.f32 %v395, %v395
        %v584 = vmul.f32 %v400, %v400
        %v585 = vmul.f32 %v405, %v405
        %v586 = vmul.f32 %v410, %v410
        %v587 = vmul.f32 %v415, %v415
        %v588 = vmul.f32 %v420, %v420
        %v589 = vmul.f32 %v425, %v425
        %v590 = vmul.f32 %v430, %v430
        %v591 = vmul.f32 %v435, %v435
        %v592 = vmul.f32 %v440, %v440
        %v593 = vmul.f32 %v445, %v445
        %v594 = vmul.f32 %v450, %v450
        %v595 = vmul.f32 %v455, %v455
        %v596 = vmul.f32 %v460, %v460
        %v597 = vmul.f32 %v465, %v465
        %v598 = vmul.f32 %v470, %v470
        %v599 = vmul.f32 %v475, %v475
        %v600 = vmul.f32 %v480, %v480
        %v601 = vmul.f32 %v485, %v485
        %v602 = vmul.f32 %v490, %v490
        %v603 = vmul.f32 %v495, %v495
        %v604 = vmul.f32 %v500, %v500
        %v605 = vmul.f32 %v505, %v505
        %v606 = vmul.f32 %v510, %v510
        %v607 = vmul.f32 %v515, %v515
        %v608 = vmul.f32 %v520, %v520
        %v609 = vmul.f32 %v525, %v525
        %v610 = vmul.f32 %v530, %v530
        %v611 = vmul.f32 %v535, %v535
        %v612 = vmul.f32 %v540, %v540
        %v613 = vadd.f32 %v581, %v582
        %v614 = vadd.f32 %v613, %v583
        %v615 = vadd.f32 %v614, %v584
        %v616 = vadd.f32 %v615, %v585
        %v617 = vadd.f32 %v616, %v586
        %v618 = vadd.f32 %v617, %v587
        %v619 = vadd.f32 %v618, %v588
        %v620 = vadd.f32 %v619, %v589
        %v621 = vadd.f32 %v620, %v590
        %v622 = vadd.f32 %v621, %v591
        %v623 = vadd.f32 %v622, %v592
        %v624 = vadd.f32 %v623, %v593
        %v625 = vadd.f32 %v624, %v594
        %v626 = vadd.f32 %v625, %v595
        %v627 = vadd.f32 %v626, %v596
        %v628 = vadd.f32 %v627, %v597
        %v629 = vadd.f32 %v628, %v598
        %v630 = vadd.f32 %v629, %v599
        %v631 = vadd.f32 %v630, %v600
        %v632 = vadd.f32 %v631, %v601
        %v633 = vadd.f32 %v632, %v602
        %v634 = vadd.f32 %v633, %v603
        %v635 = vadd.f32 %v634, %v604
        %v636 = vadd.f32 %v635, %v605
        %v637 = vadd.f32 %v636, %v606
        %v638 = vadd.f32 %v637, %v607
        %v639 = vadd.f32 %v638, %v608
        %v640 = vadd.f32 %v639, %v609
        %v641 = vadd.f32 %v640, %v610
        %v642 = vadd.f32 %v641, %v611
        %v643 = vadd.f32 %v642, %v612
        %v644 = vrot.slane %v643, 4
        %v645 = vadd.f32 %v643, %v644
        %v646 = vrot.slane %v645, 2
        %v647 = vadd.f32 %v645, %v646
        %v648 = vrot.slane %v647, 1
        %v649 = vadd.f32 %v647, %v648
        %650 = vst [vmem:[%s173] sm:$0x1] %v649
        %s651 = sand.u32 %s76, 1
        %s652 = scalar_lea.sflag [#allocation3], %s651
        %s653 = sand.u32 %s76, 1
        %s654 = scalar_lea.vmem [#allocation2], %s653
        %s655 = sand.u32 %s102, 1
        %s656 = scalar_lea.sflag [#allocation5], %s655
        %s657 = sand.u32 %s102, 1
        %s658 = scalar_lea.vmem [#allocation4], %s657
        // Predicated region
        $region29: #{tpu_custom_call.1} parent=27 // pred_check
          %p659 = pneg %p86
        $region30: #{tpu_custom_call.1} parent=27 // pred_check_branch
          %661 = sbr.rel (%p659) target = $region32
        $region31: #{tpu_custom_call.1} parent=27 // pred_region
          %s663 = ssub.s32 16, 16
          %664 = vsyncadd %s652, %s663
          %s665 = smul.addr %s21, 16
          %s666 = scalar_lea.hbm %s2, %s665
          %s668 = sshll.u32 %s654, 4
          %s669 = int_to_ptr.vmem [resolvable:$true] %s668
          %671 = dma.vmem_to_hbm [thread:$0]  %s669, 16, %s666, %s652
        $region32: #{tpu_custom_call.1} parent=27 // pred_fallthru
          _
        // Predicated region
        $region33: #{tpu_custom_call.1} parent=27 // pred_check
          %p672 = pneg %p112
        $region34: #{tpu_custom_call.1} parent=27 // pred_check_branch
          %674 = sbr.rel (%p672) target = $region36
        $region35: #{tpu_custom_call.1} parent=27 // pred_region
          %s676 = ssub.s32 16, 16
          %677 = vsyncadd %s656, %s676
          %s678 = smul.addr %s21, 16
          %s679 = scalar_lea.hbm %s3, %s678
          %s681 = sshll.u32 %s658, 4
          %s682 = int_to_ptr.vmem [resolvable:$true] %s681
          %684 = dma.vmem_to_hbm [thread:$0]  %s682, 16, %s679, %s656
        $region36: #{tpu_custom_call.1} parent=27 // pred_fallthru
          _
      $region28: #{tpu_custom_call.1} parent=5 // pred_fallthru
        _
      %p685 = scmp.le.s32.totalorder 2, %s16
      // Predicated region
      $region37: #{tpu_custom_call.1} parent=5 // pred_check
        %p686 = pneg %p685
      $region38: #{tpu_custom_call.1} parent=5 // pred_check_branch
        %688 = sbr.rel (%p686) target = $region40
      $region39: #{tpu_custom_call.1} parent=5 // pred_region
        %s689 = ssub.s32 %s16, 2
        // Predicated region
        $region41: #{tpu_custom_call.1} parent=39 // pred_check
          %p690 = pneg %p92
        $region42: #{tpu_custom_call.1} parent=39 // pred_check_branch
          %692 = sbr.rel (%p690) target = $region44
        $region43: #{tpu_custom_call.1} parent=39 // pred_region
          %s693 = sand.u32 %s77, 1
          %s694 = scalar_lea.sflag [#allocation3], %s693
          %s695 = sand.u32 %s77, 1
          %s696 = scalar_lea.vmem [#allocation2], %s695
          %697 = dma.done %s694, 16
        $region44: #{tpu_custom_call.1} parent=39 // pred_fallthru
          _
        // Predicated region
        $region45: #{tpu_custom_call.1} parent=39 // pred_check
          %p698 = pneg %p118
        $region46: #{tpu_custom_call.1} parent=39 // pred_check_branch
          %700 = sbr.rel (%p698) target = $region48
        $region47: #{tpu_custom_call.1} parent=39 // pred_region
          %s701 = sand.u32 %s103, 1
          %s702 = scalar_lea.sflag [#allocation5], %s701
          %s703 = sand.u32 %s103, 1
          %s704 = scalar_lea.vmem [#allocation4], %s703
          %705 = dma.done %s702, 16
        $region48: #{tpu_custom_call.1} parent=39 // pred_fallthru
          _
      $region40: #{tpu_custom_call.1} parent=5 // pred_fallthru
        _
    $region6: #{tpu_custom_call.1} parent=1 // loop_footer
      %s20 = sadd.s32 1, %s16
    $region7: #{tpu_custom_call.1} parent=1 // loop_footer_branch
      %15 = sbr.rel target = $region3
    $region8: #{tpu_custom_call.1} parent=1 // loop_exit
      _
    %706 = vsyncpa [#allocation3], 1
    %s707 = scalar_lea.sflag [#allocation3], 1
    %708 = vsyncpa %s707, 1
    %709 = vsyncpa [#allocation5], 1
    %s710 = scalar_lea.sflag [#allocation5], 1
    %711 = vsyncpa %s710, 1

</llo_original>
